<compile_context>
chip_gen: v6e
topology: v6e:2x2x1
jax: 0.10.0
libtpu: 0.0.40
codegen_flags: <defaults>
</compile_context>

<pallas_src>
import functools

import jax
import jax.numpy as jnp
from jax.experimental import pallas as pl
from jax.experimental.pallas import tpu as pltpu


def _activation(name):
    if name == "relu":
        return lambda h: jnp.maximum(h, 0.0)
    if name == "tanh":
        return jnp.tanh
    if name == "linear":
        return lambda h: h
    raise ValueError(f"Unknown activation {name}")


# ---------------------------------------------------------------------------
# Fused path: no grid; all layers unrolled inside one kernel invocation.
# ---------------------------------------------------------------------------
def _resnet_fused_kernel(delta_ref, x_ref, a_ref, b_ref, o_ref, *, num_layers, activation):
    """delta: SMEM (L,) f32; x: VMEM (B,D) f32; A: VMEM (L,D,D) bf16/f32;
    b: VMEM (L,1,D) f32; o: VMEM (B,D) f32."""
    sigma = _activation(activation)
    a_dtype = a_ref.dtype
    x = x_ref[...]
    # Statically unrolled: L is small on this path; static indices give the LLO
    # scheduler full visibility to overlap the per-layer matmuls and VPU epilogues.
    for l in range(num_layers):
        h = jnp.dot(x.astype(a_dtype), a_ref[l], preferred_element_type=jnp.float32)
        h = sigma(h + b_ref[l])
        x = x + delta_ref[l] * h
    o_ref[...] = x


# ---------------------------------------------------------------------------
# Grid path: (layer, k) grid; resident output state + f32 accumulator scratch.
# ---------------------------------------------------------------------------
def _resnet_grid_kernel(delta_ref, x_ref, a_ref, b_ref, o_ref, acc_ref, *,
                        block_k, activation):
    """One grid step = one contraction tile of one residual layer.

    delta_ref: SMEM (L,)        per-layer scale (scalar-prefetched)
    x_ref:     VMEM (B, D)      initial input (constant block; used only once)
    a_ref:     VMEM (tk, D)     A[l][k*tk:(k+1)*tk, :]  (bf16 HBM stream)
    b_ref:     VMEM (1, D)      b[l]
    o_ref:     VMEM (B, D)      running state x[l]; resident across the whole grid
    acc_ref:   VMEM (B, D) f32  partial h = x[l] @ A[l]
    """
    l = pl.program_id(0)
    k = pl.program_id(1)
    nk = pl.num_programs(1)
    sigma = _activation(activation)

    @pl.when(jnp.logical_and(l == 0, k == 0))
    def _seed():
        o_ref[...] = x_ref[...]

    @pl.when(k == 0)
    def _zero():
        acc_ref[...] = jnp.zeros_like(acc_ref)

    start = pl.multiple_of(k * block_k, block_k)
    x_slice = o_ref[:, pl.ds(start, block_k)]
    acc_ref[...] += jnp.dot(x_slice.astype(a_ref.dtype), a_ref[...],
                            preferred_element_type=jnp.float32)

    @pl.when(k == nk - 1)
    def _finalize():
        h = sigma(acc_ref[...] + b_ref[...])
        o_ref[...] = o_ref[...] + delta_ref[l] * h


# ---------------------------------------------------------------------------
# Wrapper
# ---------------------------------------------------------------------------
def _round_up(v, m):
    return ((v + m - 1) // m) * m


def _pick_block_k(d_pad, itemsize, budget_bytes):
    """Largest tk (multiple of 128, divides d_pad) such that a double-buffered
    (tk, d_pad) A tile fits in budget_bytes."""
    m = d_pad // 128
    for d in sorted((d for d in range(1, m + 1) if m % d == 0), reverse=True):
        tk = 128 * d
        if 2 * tk * d_pad * itemsize <= budget_bytes:
            return tk
    return 128


def final_resnet_forward(x, A, b, delta, *, activation="relu",
                         param_dtype=jnp.bfloat16, path="auto", block_k=None):
    """x: (B, D) f32, A: (L, D, D), b: (L, D), delta: (L,) per-layer scale.

    Matches FinalResNet.forward: x <- x + delta[l] * sigma(x @ A[l] + b[l]).
    A is streamed in `param_dtype` (bf16 by default); all other math is f32.
    """
    B, D = x.shape
    L = A.shape[0]
    a_itemsize = jnp.dtype(param_dtype).itemsize

    # Lane/sublane-dense padding; sigma(0) == 0 for relu/tanh/linear so the
    # zero-padded rows/columns never contaminate the real region.
    B_pad = _round_up(max(B, 8), 8)
    D_pad = _round_up(max(D, 128), 128)

    x_p = jnp.zeros((B_pad, D_pad), jnp.float32).at[:B, :D].set(x.astype(jnp.float32))
    A_p = jnp.zeros((L, D_pad, D_pad), param_dtype).at[:, :D, :D].set(A.astype(param_dtype))
    b_p = jnp.zeros((L, 1, D_pad), jnp.float32).at[:, 0, :D].set(b.astype(jnp.float32))
    delta_p = delta.astype(jnp.float32)

    a_bytes = L * D_pad * D_pad * a_itemsize
    state_bytes = B_pad * D_pad * 4

    if path == "auto":
        path = "fused" if (a_bytes <= (4 << 20) and L <= 32) else "grid"

    if path == "fused":
        vmem_est = a_bytes + L * 8 * D_pad * 4 + 3 * state_bytes + (8 << 20)
        out = pl.pallas_call(
            functools.partial(_resnet_fused_kernel, num_layers=L, activation=activation),
            out_shape=jax.ShapeDtypeStruct((B_pad, D_pad), jnp.float32),
            in_specs=[
                pl.BlockSpec(memory_space=pltpu.MemorySpace.SMEM),   # delta (scalars)
                pl.BlockSpec(memory_space=pltpu.MemorySpace.VMEM),   # x
                pl.BlockSpec(memory_space=pltpu.MemorySpace.VMEM),   # A (all layers)
                pl.BlockSpec(memory_space=pltpu.MemorySpace.VMEM),   # b (all layers)
            ],
            out_specs=pl.BlockSpec(memory_space=pltpu.MemorySpace.VMEM),
            compiler_params=pltpu.CompilerParams(
                vmem_limit_bytes=int(min(max(vmem_est, 32 << 20), 56 << 20))),
        )(delta_p, x_p, A_p, b_p)
        return out[:B, :D]

    # ---- grid path ----
    a_budget = 24 << 20  # VMEM budget for the streamed A buffers (safe within v7x's 64 MiB)
    tk = block_k if block_k is not None else _pick_block_k(D_pad, a_itemsize, a_budget)
    assert D_pad % tk == 0 and tk % 128 == 0, "block_k must divide padded D and be lane-aligned"
    n_buf = 3 if 3 * tk * D_pad * a_itemsize <= a_budget else 2

    a_index = lambda l, k, delta: (l, k, 0)
    a_block = (pl.Squeezed(), tk, D_pad)
    try:
        # Deeper A pipeline hides HBM DMA jitter; the kernel lives on this stream.
        if n_buf > 2:
            a_spec = pl.BlockSpec(a_block, a_index, pipeline_mode=pl.Buffered(n_buf))
        else:
            a_spec = pl.BlockSpec(a_block, a_index)
    except (TypeError, AttributeError):  # pipeline_mode unavailable -> default depth 2
        a_spec = pl.BlockSpec(a_block, a_index)

    vmem_est = (n_buf * tk * D_pad * a_itemsize     # A buffers
                + 2 * state_bytes                   # x (double-buffered input)
                + 2 * state_bytes                   # resident output state (conservative)
                + state_bytes                       # f32 accumulator scratch
                + n_buf * 8 * D_pad * 4             # b tiles (sublane padded)
                + (8 << 20))                        # headroom
    vmem_limit = int(min(max(vmem_est, 32 << 20), 56 << 20))

    out = pl.pallas_call(
        functools.partial(_resnet_grid_kernel, block_k=tk, activation=activation),
        out_shape=jax.ShapeDtypeStruct((B_pad, D_pad), jnp.float32),
        grid_spec=pltpu.PrefetchScalarGridSpec(
            num_scalar_prefetch=1,                  # delta -> SMEM, readable every step
            grid=(L, D_pad // tk),
            in_specs=[
                pl.BlockSpec((B_pad, D_pad), lambda l, k, delta: (0, 0)),               # x
                a_spec,                                                                 # A[l] k-tile
                pl.BlockSpec((pl.Squeezed(), 1, D_pad), lambda l, k, delta: (l, 0, 0)),  # b[l]
            ],
            out_specs=pl.BlockSpec((B_pad, D_pad), lambda l, k, delta: (0, 0)),  # resident state
            scratch_shapes=[pltpu.VMEM((B_pad, D_pad), jnp.float32)],
        ),
        compiler_params=pltpu.CompilerParams(
            # Both axes are sequential: layers are a recurrence, k is a reduction.
            # (No megacore split: the kernel is HBM-bound on the shared A stream.)
            dimension_semantics=("arbitrary", "arbitrary"),
            vmem_limit_bytes=vmem_limit,
        ),
    )(delta_p, x_p, A_p, b_p)
    return out[:B, :D]


# ---------------------------------------------------------------------------
# Host-side param init (mirrors FinalResNet.init_values('xavier')) + reference
# ---------------------------------------------------------------------------
def make_params(key, dim, num_layers, delta_type, initial_sd):
    ka, kb, kd = jax.random.split(key, 3)
    A = jax.random.normal(ka, (num_layers, dim, dim), jnp.float32) * (initial_sd / dim)
    b = jax.random.normal(kb, (num_layers, dim), jnp.float32) * (
        initial_sd / jnp.sqrt(jnp.float32(dim)))
    if delta_type == "shared":
        # FinalResNet.forward uses abs(delta) * h for the shared case; abs() is
        # applied here host-side so the kernel's plain multiply matches the spec.
        delta = jnp.full((num_layers,), jnp.abs(jnp.float32(1.0 / num_layers)), jnp.float32)
    elif delta_type == "multi":
        delta = jax.random.normal(kd, (num_layers,), jnp.float32) * (1.0 / num_layers)
    else:
        delta = jnp.ones((num_layers,), jnp.float32)
    return A, b, delta


def reference_forward(x, A, b, delta, *, activation="relu", param_dtype=jnp.float32):
    """Pure-JAX reference emulating the kernel's numerics (A/lhs in param_dtype,
    f32 accumulation and f32 bias/activation/residual math)."""
    sigma = _activation(activation)
    x = x.astype(jnp.float32)
    A = A.astype(param_dtype)
    for l in range(A.shape[0]):
        h = jnp.dot(x.astype(param_dtype), A[l], preferred_element_type=jnp.float32)
        h = sigma(h + b[l].astype(jnp.float32))
        x = x + delta[l].astype(jnp.float32) * h
    return x


if __name__ == "__main__":
    # --- Test 1: demo sizes -> fused (single-invocation) path -------------------
    batch, dim, num_layers = 8, 32, 4
    key = jax.random.PRNGKey(0)
    kx, kp = jax.random.split(key)
    x = jax.random.normal(kx, (batch, dim), jnp.float32)
    A, b, delta = make_params(kp, dim, num_layers, "shared", 1.0)

    out = jax.block_until_ready(
        final_resnet_forward(x, A, b, delta, activation="relu", param_dtype=jnp.bfloat16))
    ref = reference_forward(x, A, b, delta, activation="relu", param_dtype=jnp.bfloat16)
    assert out.shape == (batch, dim)
    assert jnp.allclose(out, ref, atol=2e-3, rtol=2e-3), "fused bf16 path mismatch"

    out32 = jax.block_until_ready(
        final_resnet_forward(x, A, b, delta, activation="relu", param_dtype=jnp.float32))
    ref32 = reference_forward(x, A, b, delta, activation="relu", param_dtype=jnp.float32)
    assert jnp.allclose(out32, ref32, atol=1e-5, rtol=1e-5), "fused f32 path mismatch"

    # --- Test 2: exercise the (layer, k)-tiled grid path -------------------------
    batch2, dim2, num_layers2 = 16, 256, 3
    kx2, kp2 = jax.random.split(jax.random.PRNGKey(1))
    x2 = jax.random.normal(kx2, (batch2, dim2), jnp.float32)
    A2, b2, delta2 = make_params(kp2, dim2, num_layers2, "multi", 1.0)

    out2 = jax.block_until_ready(
        final_resnet_forward(x2, A2, b2, delta2, activation="tanh",
                             param_dtype=jnp.bfloat16, path="grid", block_k=128))
    ref2 = reference_forward(x2, A2, b2, delta2, activation="tanh", param_dtype=jnp.bfloat16)
    assert out2.shape == (batch2, dim2)
    assert jnp.allclose(out2, ref2, atol=2e-3, rtol=2e-3), "grid path mismatch"

    print("KERNEL_OK")
</pallas_src>

<mosaic_0001>
module attributes {stable_mosaic.version = 11 : i64} {
  func.func @_resnet_fused_kernel(%arg0: memref<4xf32, #tpu.memory_space<smem>>, %arg1: memref<8x128xf32, #tpu.memory_space<vmem>>, %arg2: memref<4x128x128xbf16, #tpu.memory_space<vmem>>, %arg3: memref<4x1x128xf32, #tpu.memory_space<vmem>>, %arg4: memref<8x128xf32, #tpu.memory_space<vmem>>) attributes {dimension_semantics = [], scalar_prefetch = 0 : i64, scratch_operands = 0 : i64, tpu.core_type = #tpu.core_type<tc>} {
    %c0 = arith.constant 0 : index
    %c0_0 = arith.constant 0 : index
    %0 = vector.load %arg1[%c0, %c0_0] : memref<8x128xf32, #tpu.memory_space<vmem>>, vector<8x128xf32>
    %1 = arith.truncf %0 : vector<8x128xf32> to vector<8x128xbf16>
    %c0_1 = arith.constant 0 : index
    %c0_2 = arith.constant 0 : index
    %c0_3 = arith.constant 0 : index
    %2 = vector.load %arg2[%c0_1, %c0_2, %c0_3] : memref<4x128x128xbf16, #tpu.memory_space<vmem>>, vector<1x128x128xbf16>
    %3 = vector.shape_cast %2 : vector<1x128x128xbf16> to vector<128x128xbf16>
    %cst = arith.constant dense<0.000000e+00> : vector<8x128xf32>
    %4 = tpu.matmul %1, %3, %cst {dimension_numbers = #tpu.dot_dimension_numbers<[1], [0], [0], [1], [0, 0, 1, 1], [], []>} : vector<8x128xbf16>, vector<128x128xbf16>, vector<8x128xf32> -> vector<8x128xf32>
    %c0_4 = arith.constant 0 : index
    %c0_5 = arith.constant 0 : index
    %c0_6 = arith.constant 0 : index
    %5 = vector.load %arg3[%c0_4, %c0_5, %c0_6] : memref<4x1x128xf32, #tpu.memory_space<vmem>>, vector<1x1x128xf32>
    %6 = vector.shape_cast %5 : vector<1x1x128xf32> to vector<1x128xf32>
    %7 = vector.broadcast %6 : vector<1x128xf32> to vector<8x128xf32>
    %8 = arith.addf %4, %7 : vector<8x128xf32>
    %cst_7 = arith.constant 0.000000e+00 : f32
    %9 = vector.broadcast %cst_7 : f32 to vector<8x128xf32>
    %10 = arith.maximumf %8, %9 : vector<8x128xf32>
    %c0_8 = arith.constant 0 : index
    %11 = memref.load %arg0[%c0_8] : memref<4xf32, #tpu.memory_space<smem>>
    %12 = vector.broadcast %11 : f32 to vector<8x128xf32>
    %13 = arith.mulf %12, %10 : vector<8x128xf32>
    %14 = arith.addf %0, %13 : vector<8x128xf32>
    %15 = arith.truncf %14 : vector<8x128xf32> to vector<8x128xbf16>
    %c1 = arith.constant 1 : index
    %c0_9 = arith.constant 0 : index
    %c0_10 = arith.constant 0 : index
    %16 = vector.load %arg2[%c1, %c0_9, %c0_10] : memref<4x128x128xbf16, #tpu.memory_space<vmem>>, vector<1x128x128xbf16>
    %17 = vector.shape_cast %16 : vector<1x128x128xbf16> to vector<128x128xbf16>
    %cst_11 = arith.constant dense<0.000000e+00> : vector<8x128xf32>
    %18 = tpu.matmul %15, %17, %cst_11 {dimension_numbers = #tpu.dot_dimension_numbers<[1], [0], [0], [1], [0, 0, 1, 1], [], []>} : vector<8x128xbf16>, vector<128x128xbf16>, vector<8x128xf32> -> vector<8x128xf32>
    %c1_12 = arith.constant 1 : index
    %c0_13 = arith.constant 0 : index
    %c0_14 = arith.constant 0 : index
    %19 = vector.load %arg3[%c1_12, %c0_13, %c0_14] : memref<4x1x128xf32, #tpu.memory_space<vmem>>, vector<1x1x128xf32>
    %20 = vector.shape_cast %19 : vector<1x1x128xf32> to vector<1x128xf32>
    %21 = vector.broadcast %20 : vector<1x128xf32> to vector<8x128xf32>
    %22 = arith.addf %18, %21 : vector<8x128xf32>
    %cst_15 = arith.constant 0.000000e+00 : f32
    %23 = vector.broadcast %cst_15 : f32 to vector<8x128xf32>
    %24 = arith.maximumf %22, %23 : vector<8x128xf32>
    %c1_16 = arith.constant 1 : index
    %25 = memref.load %arg0[%c1_16] : memref<4xf32, #tpu.memory_space<smem>>
    %26 = vector.broadcast %25 : f32 to vector<8x128xf32>
    %27 = arith.mulf %26, %24 : vector<8x128xf32>
    %28 = arith.addf %14, %27 : vector<8x128xf32>
    %29 = arith.truncf %28 : vector<8x128xf32> to vector<8x128xbf16>
    %c2 = arith.constant 2 : index
    %c0_17 = arith.constant 0 : index
    %c0_18 = arith.constant 0 : index
    %30 = vector.load %arg2[%c2, %c0_17, %c0_18] : memref<4x128x128xbf16, #tpu.memory_space<vmem>>, vector<1x128x128xbf16>
    %31 = vector.shape_cast %30 : vector<1x128x128xbf16> to vector<128x128xbf16>
    %cst_19 = arith.constant dense<0.000000e+00> : vector<8x128xf32>
    %32 = tpu.matmul %29, %31, %cst_19 {dimension_numbers = #tpu.dot_dimension_numbers<[1], [0], [0], [1], [0, 0, 1, 1], [], []>} : vector<8x128xbf16>, vector<128x128xbf16>, vector<8x128xf32> -> vector<8x128xf32>
    %c2_20 = arith.constant 2 : index
    %c0_21 = arith.constant 0 : index
    %c0_22 = arith.constant 0 : index
    %33 = vector.load %arg3[%c2_20, %c0_21, %c0_22] : memref<4x1x128xf32, #tpu.memory_space<vmem>>, vector<1x1x128xf32>
    %34 = vector.shape_cast %33 : vector<1x1x128xf32> to vector<1x128xf32>
    %35 = vector.broadcast %34 : vector<1x128xf32> to vector<8x128xf32>
    %36 = arith.addf %32, %35 : vector<8x128xf32>
    %cst_23 = arith.constant 0.000000e+00 : f32
    %37 = vector.broadcast %cst_23 : f32 to vector<8x128xf32>
    %38 = arith.maximumf %36, %37 : vector<8x128xf32>
    %c2_24 = arith.constant 2 : index
    %39 = memref.load %arg0[%c2_24] : memref<4xf32, #tpu.memory_space<smem>>
    %40 = vector.broadcast %39 : f32 to vector<8x128xf32>
    %41 = arith.mulf %40, %38 : vector<8x128xf32>
    %42 = arith.addf %28, %41 : vector<8x128xf32>
    %43 = arith.truncf %42 : vector<8x128xf32> to vector<8x128xbf16>
    %c3 = arith.constant 3 : index
    %c0_25 = arith.constant 0 : index
    %c0_26 = arith.constant 0 : index
    %44 = vector.load %arg2[%c3, %c0_25, %c0_26] : memref<4x128x128xbf16, #tpu.memory_space<vmem>>, vector<1x128x128xbf16>
    %45 = vector.shape_cast %44 : vector<1x128x128xbf16> to vector<128x128xbf16>
    %cst_27 = arith.constant dense<0.000000e+00> : vector<8x128xf32>
    %46 = tpu.matmul %43, %45, %cst_27 {dimension_numbers = #tpu.dot_dimension_numbers<[1], [0], [0], [1], [0, 0, 1, 1], [], []>} : vector<8x128xbf16>, vector<128x128xbf16>, vector<8x128xf32> -> vector<8x128xf32>
    %c3_28 = arith.constant 3 : index
    %c0_29 = arith.constant 0 : index
    %c0_30 = arith.constant 0 : index
    %47 = vector.load %arg3[%c3_28, %c0_29, %c0_30] : memref<4x1x128xf32, #tpu.memory_space<vmem>>, vector<1x1x128xf32>
    %48 = vector.shape_cast %47 : vector<1x1x128xf32> to vector<1x128xf32>
    %49 = vector.broadcast %48 : vector<1x128xf32> to vector<8x128xf32>
    %50 = arith.addf %46, %49 : vector<8x128xf32>
    %cst_31 = arith.constant 0.000000e+00 : f32
    %51 = vector.broadcast %cst_31 : f32 to vector<8x128xf32>
    %52 = arith.maximumf %50, %51 : vector<8x128xf32>
    %c3_32 = arith.constant 3 : index
    %53 = memref.load %arg0[%c3_32] : memref<4xf32, #tpu.memory_space<smem>>
    %54 = vector.broadcast %53 : f32 to vector<8x128xf32>
    %55 = arith.mulf %54, %52 : vector<8x128xf32>
    %56 = arith.addf %42, %55 : vector<8x128xf32>
    %c0_33 = arith.constant 0 : index
    %c0_34 = arith.constant 0 : index
    %57 = vector.load %arg4[%c0_33, %c0_34] : memref<8x128xf32, #tpu.memory_space<vmem>>, vector<8x128xf32>
    tpu.vector_store %arg4[%c0_33, %c0_34], %56 {strides = array<i32>} : memref<8x128xf32, #tpu.memory_space<vmem>>, vector<8x128xf32>,
    return
  }
}

</mosaic_0001>

<llo_original>
// kernel: tpu_custom_call.1
$region0: #{tpu_custom_call.1}
  #allocation0 [shape = 'u32[]', space=smem, size = 0x4, offset = 0x4, fixed_abs, tag = 'smem constant byte address 0x4 - core index']
  #allocation1 [shape = 'u32[144,128]{1,0:T(1,128)}', space=vmem, size = 0x12000, scoped, tag = 'internal scratch']
  %s0 = inlined_call_operand.hbm [shape: f32[4], index: 0, kind: input, shape index: {}]
  %s1 = inlined_call_operand.hbm [shape: f32[8,128], index: 1, kind: input, shape index: {}]
  %s2 = inlined_call_operand.hbm [shape: bf16[4,128,128], index: 2, kind: input, shape index: {}]
  %s3 = inlined_call_operand.vmem [shape: f32[4,1,128], index: 3, kind: input, shape index: {}]
  %s4 = inlined_call_operand.hbm [shape: f32[8,128], index: 4, kind: output, shape index: {}]
  %s5 = sld [smem:[#allocation0]]
  $region38: #{tpu_custom_call.1} parent=0
    _
  %s7 = ssub.s32 1, %s5
  %s8 = scalar_select 0, %s7, %s5
  $region1: #{tpu_custom_call.1} parent=0
    #allocation2 [shape = 'u8[512]{0}', space=smem, size = 0x200, scoped, tag = 'input window, operand 0, single buffered']
    #allocation3 [shape = 's32[1]{0}', space=sflag, size = 0x4, scoped, tag = 'scoped memory for tpu_custom_call.1']
    #allocation4 [shape = 's32[1]{0}', space=sflag, size = 0x4, scoped, tag = 'scoped memory for tpu_custom_call.1']
    #allocation5 [shape = 's32[1]{0}', space=sflag, size = 0x4, scoped, tag = 'scoped memory for tpu_custom_call.1']
    #allocation6 [shape = 'u8[4096]{0}', space=vmem, size = 0x1000, scoped, tag = 'input window, operand 1, single buffered']
    #allocation7 [shape = 'u8[131072]{0}', space=vmem, size = 0x20000, scoped, tag = 'input window, operand 2, single buffered']
    #allocation8 [shape = 's32[1]{0}', space=sflag, size = 0x4, scoped, tag = 'scoped memory for tpu_custom_call.1']
    #allocation9 [shape = 'u8[4096]{0}', space=vmem, size = 0x1000, scoped, tag = 'output window, operand 0, single buffered']
    %9 = vsyncpa [#allocation5], 0
    %10 = vsyncpa [#allocation3], 0
    %11 = vsyncpa [#allocation8], 0
    %12 = vsyncpa [#allocation4], 0
    // Predicated region
    $region2: #{tpu_custom_call.1} parent=1 // pred_check
      _
    $region3: #{tpu_custom_call.1} parent=1 // pred_check_branch
      %14 = sbr.rel (0) target = $region5
    $region4: #{tpu_custom_call.1} parent=1 // pred_region
      %s16 = ssub.s32 16, 16
      %17 = vsyncadd [#allocation5], %s16
      %20 = dma.hbm_to_smem %s0, 16, [#allocation2], [#allocation5]
    $region5: #{tpu_custom_call.1} parent=1 // pred_fallthru
      _
    // Predicated region
    $region6: #{tpu_custom_call.1} parent=1 // pred_check
      _
    $region7: #{tpu_custom_call.1} parent=1 // pred_check_branch
      %22 = sbr.rel (0) target = $region9
    $region8: #{tpu_custom_call.1} parent=1 // pred_region
      %s24 = ssub.s32 128, 128
      %25 = vsyncadd [#allocation3], %s24
      %s27 = sshll.u32 [#allocation6], 4
      %s28 = int_to_ptr.vmem [resolvable:$true] %s27
      %30 = dma.hbm_to_vmem [thread:$0]  %s1, 128, %s28, [#allocation3]
    $region9: #{tpu_custom_call.1} parent=1 // pred_fallthru
      _
    // Predicated region
    $region10: #{tpu_custom_call.1} parent=1 // pred_check
      _
    $region11: #{tpu_custom_call.1} parent=1 // pred_check_branch
      %32 = sbr.rel (0) target = $region13
    $region12: #{tpu_custom_call.1} parent=1 // pred_region
      %s34 = ssub.s32 4096, 4096
      %35 = vsyncadd [#allocation8], %s34
      %s36 = sshll.u32 [#allocation7], 4
      %s37 = int_to_ptr.vmem [resolvable:$true] %s36
      %42 = dma.hbm_to_vmem [thread:$0]  %s2, 4096, %s37, [#allocation8], 64, 64, 4
    $region13: #{tpu_custom_call.1} parent=1 // pred_fallthru
      _
    // Predicated region
    $region14: #{tpu_custom_call.1} parent=1 // pred_check
      _
    $region15: #{tpu_custom_call.1} parent=1 // pred_check_branch
      %44 = sbr.rel (0) target = $region17
    $region16: #{tpu_custom_call.1} parent=1 // pred_region
      _
    $region17: #{tpu_custom_call.1} parent=1 // pred_fallthru
      _
    // Predicated region
    $region18: #{tpu_custom_call.1} parent=1 // pred_check
      _
    $region19: #{tpu_custom_call.1} parent=1 // pred_check_branch
      %46 = sbr.rel (0) target = $region21
    $region20: #{tpu_custom_call.1} parent=1 // pred_region
      %47 = dma.done [#allocation5], 16
    $region21: #{tpu_custom_call.1} parent=1 // pred_fallthru
      _
    // Predicated region
    $region22: #{tpu_custom_call.1} parent=1 // pred_check
      _
    $region23: #{tpu_custom_call.1} parent=1 // pred_check_branch
      %49 = sbr.rel (0) target = $region25
    $region24: #{tpu_custom_call.1} parent=1 // pred_region
      %50 = dma.done [#allocation3], 128
    $region25: #{tpu_custom_call.1} parent=1 // pred_fallthru
      _
    // Predicated region
    $region26: #{tpu_custom_call.1} parent=1 // pred_check
      _
    $region27: #{tpu_custom_call.1} parent=1 // pred_check_branch
      %52 = sbr.rel (0) target = $region29
    $region28: #{tpu_custom_call.1} parent=1 // pred_region
      %53 = dma.done [#allocation8], 4096
    $region29: #{tpu_custom_call.1} parent=1 // pred_fallthru
      _
    %54 = sfence
    %v56 = vld [vmem:[#allocation6] sm:$0xff]
    %v57 = vpack.c.bf16 %v56, %v56
    %v58 = vld [vmem:[#allocation7] sm:$0xf]
    %v59 = vld [vmem:[#allocation7 + $0x4] sm:$0xf]
    %v60 = vld [vmem:[#allocation7 + $0x8] sm:$0xf]
    %v61 = vld [vmem:[#allocation7 + $0xc] sm:$0xf]
    %v62 = vld [vmem:[#allocation7 + $0x10] sm:$0xf]
    %v63 = vld [vmem:[#allocation7 + $0x14] sm:$0xf]
    %v64 = vld [vmem:[#allocation7 + $0x18] sm:$0xf]
    %v65 = vld [vmem:[#allocation7 + $0x1c] sm:$0xf]
    %v66 = vld [vmem:[#allocation7 + $0x20] sm:$0xf]
    %v67 = vld [vmem:[#allocation7 + $0x24] sm:$0xf]
    %v68 = vld [vmem:[#allocation7 + $0x28] sm:$0xf]
    %v69 = vld [vmem:[#allocation7 + $0x2c] sm:$0xf]
    %v70 = vld [vmem:[#allocation7 + $0x30] sm:$0xf]
    %v71 = vld [vmem:[#allocation7 + $0x34] sm:$0xf]
    %v72 = vld [vmem:[#allocation7 + $0x38] sm:$0xf]
    %v73 = vld [vmem:[#allocation7 + $0x3c] sm:$0xf]
    %v74 = vld [vmem:[%s3] sm:$0x1]
    %v76 = vlaneseq
    %v77 = vshrl.u32 %v76, 7
    %v78 = vsub.s32 0, %v77
    %v79 = vrot.slane %v74, %v78
    %v97 = vunpack.c.l.b16 %v58
    %v98 = vunpack.c.l.b16 %v59
    %v99 = vunpack.c.l.b16 %v60
    %v100 = vunpack.c.l.b16 %v61
    %v101 = vunpack.c.l.b16 %v62
    %v102 = vunpack.c.l.b16 %v63
    %v103 = vunpack.c.l.b16 %v64
    %v104 = vunpack.c.l.b16 %v65
    %v105 = vunpack.c.l.b16 %v66
    %v106 = vunpack.c.l.b16 %v67
    %v107 = vunpack.c.l.b16 %v68
    %v108 = vunpack.c.l.b16 %v69
    %v109 = vunpack.c.l.b16 %v70
    %v110 = vunpack.c.l.b16 %v71
    %v111 = vunpack.c.l.b16 %v72
    %v112 = vunpack.c.l.b16 %v73
    %v113 = vpack.c.b16 %v98, %v97
    %v114 = vpack.c.b16 %v100, %v99
    %v115 = vpack.c.b16 %v102, %v101
    %v116 = vpack.c.b16 %v104, %v103
    %v117 = vpack.c.b16 %v106, %v105
    %v118 = vpack.c.b16 %v108, %v107
    %v119 = vpack.c.b16 %v110, %v109
    %v120 = vpack.c.b16 %v112, %v111
    %129 = vmatprep.subr.bf16.mxu0 0
    %130 = vmatpush1.bf16.msra.mxu0 %v120
    %131 = vmatprep.subr.bf16.mxu0 0
    %132 = vmatpush1.bf16.msra.mxu0 %v119
    %133 = vmatprep.subr.bf16.mxu0 0
    %134 = vmatpush1.bf16.msra.mxu0 %v118
    %135 = vmatprep.subr.bf16.mxu0 0
    %136 = vmatpush1.bf16.msra.mxu0 %v117
    %137 = vmatprep.subr.bf16.mxu0 0
    %138 = vmatpush1.bf16.msra.mxu0 %v116
    %139 = vmatprep.subr.bf16.mxu0 0
    %140 = vmatpush1.bf16.msra.mxu0 %v115
    %141 = vmatprep.subr.bf16.mxu0 0
    %142 = vmatpush1.bf16.msra.mxu0 %v114
    %143 = vmatprep.subr.bf16.mxu0 0
    %144 = vmatpush1.bf16.msra.mxu0 %v113
    %145 = vmatprep.subr.bf16.mxu0 0
    %146 = vmatpush2.bf16.msra.mxu0 0
    %147 = vmatprep.subr.bf16.mxu0 0
    %148 = vmatpush2.bf16.msra.mxu0 0
    %149 = vmatprep.subr.bf16.mxu0 0
    %150 = vmatpush2.bf16.msra.mxu0 0
    %151 = vmatprep.subr.bf16.mxu0 0
    %152 = vmatpush2.bf16.msra.mxu0 0
    %153 = vmatprep.subr.bf16.mxu0 0
    %154 = vmatpush2.bf16.msra.mxu0 0
    %155 = vmatprep.subr.bf16.mxu0 0
    %156 = vmatpush2.bf16.msra.mxu0 0
    %157 = vmatprep.subr.bf16.mxu0 0
    %158 = vmatpush2.bf16.msra.mxu0 0
    %159 = vmatprep.subr.bf16.mxu0 0
    %160 = vmatpush2.bf16.msra.mxu0 0
    %161 = vmatprep.mubr.bf16.mxu0 0
    %162 = vmatmul.mubr.bf16.gmra.mxu0 %v57
    %v163 = vpop.f32.mrf.mxu0
    %v164 = vadd.f32 %v79, %v163
    %v165 = vpop.f32.mrf.mxu0
    %v166 = vpop.f32.mrf.mxu0
    %v167 = vpop.f32.mrf.mxu0
    %168 = vdwg.mxu0
    %v169 = vmax.f32 %v164, 0.0
    %s170 = sld [smem:[#allocation2]]
    %v171 = vstv %s170
    %v172 = vmul.f32 %v171, %v169
    %v173 = vadd.f32 %v56, %v172
    %v174 = vpack.c.bf16 %v173, %v173
    %s175 = scalar_lea.vmem [#allocation7], 64
    %v176 = vld [vmem:[%s175] sm:$0xf]
    %v177 = vld [vmem:[%s175 + $0x4] sm:$0xf]
    %v178 = vld [vmem:[%s175 + $0x8] sm:$0xf]
    %v179 = vld [vmem:[%s175 + $0xc] sm:$0xf]
    %v180 = vld [vmem:[%s175 + $0x10] sm:$0xf]
    %v181 = vld [vmem:[%s175 + $0x14] sm:$0xf]
    %v182 = vld [vmem:[%s175 + $0x18] sm:$0xf]
    %v183 = vld [vmem:[%s175 + $0x1c] sm:$0xf]
    %v184 = vld [vmem:[%s175 + $0x20] sm:$0xf]
    %v185 = vld [vmem:[%s175 + $0x24] sm:$0xf]
    %v186 = vld [vmem:[%s175 + $0x28] sm:$0xf]
    %v187 = vld [vmem:[%s175 + $0x2c] sm:$0xf]
    %v188 = vld [vmem:[%s175 + $0x30] sm:$0xf]
    %v189 = vld [vmem:[%s175 + $0x34] sm:$0xf]
    %v190 = vld [vmem:[%s175 + $0x38] sm:$0xf]
    %v191 = vld [vmem:[%s175 + $0x3c] sm:$0xf]
    %s192 = scalar_lea.vmem %s3, 1
    %v193 = vld [vmem:[%s192] sm:$0x1]
    %v195 = vlaneseq
    %v196 = vshrl.u32 %v195, 7
    %v197 = vsub.s32 0, %v196
    %v198 = vrot.slane %v193, %v197
    %v216 = vunpack.c.l.b16 %v176
    %v217 = vunpack.c.l.b16 %v177
    %v218 = vunpack.c.l.b16 %v178
    %v219 = vunpack.c.l.b16 %v179
    %v220 = vunpack.c.l.b16 %v180
    %v221 = vunpack.c.l.b16 %v181
    %v222 = vunpack.c.l.b16 %v182
    %v223 = vunpack.c.l.b16 %v183
    %v224 = vunpack.c.l.b16 %v184
    %v225 = vunpack.c.l.b16 %v185
    %v226 = vunpack.c.l.b16 %v186
    %v227 = vunpack.c.l.b16 %v187
    %v228 = vunpack.c.l.b16 %v188
    %v229 = vunpack.c.l.b16 %v189
    %v230 = vunpack.c.l.b16 %v190
    %v231 = vunpack.c.l.b16 %v191
    %v232 = vpack.c.b16 %v217, %v216
    %v233 = vpack.c.b16 %v219, %v218
    %v234 = vpack.c.b16 %v221, %v220
    %v235 = vpack.c.b16 %v223, %v222
    %v236 = vpack.c.b16 %v225, %v224
    %v237 = vpack.c.b16 %v227, %v226
    %v238 = vpack.c.b16 %v229, %v228
    %v239 = vpack.c.b16 %v231, %v230
    %248 = vmatprep.subr.bf16.mxu0 0
    %249 = vmatpush1.bf16.msra.mxu0 %v239
    %250 = vmatprep.subr.bf16.mxu0 0
    %251 = vmatpush1.bf16.msra.mxu0 %v238
    %252 = vmatprep.subr.bf16.mxu0 0
    %253 = vmatpush1.bf16.msra.mxu0 %v237
    %254 = vmatprep.subr.bf16.mxu0 0
    %255 = vmatpush1.bf16.msra.mxu0 %v236
    %256 = vmatprep.subr.bf16.mxu0 0
    %257 = vmatpush1.bf16.msra.mxu0 %v235
    %258 = vmatprep.subr.bf16.mxu0 0
    %259 = vmatpush1.bf16.msra.mxu0 %v234
    %260 = vmatprep.subr.bf16.mxu0 0
    %261 = vmatpush1.bf16.msra.mxu0 %v233
    %262 = vmatprep.subr.bf16.mxu0 0
    %263 = vmatpush1.bf16.msra.mxu0 %v232
    %264 = vmatprep.subr.bf16.mxu0 0
    %265 = vmatpush2.bf16.msra.mxu0 0
    %266 = vmatprep.subr.bf16.mxu0 0
    %267 = vmatpush2.bf16.msra.mxu0 0
    %268 = vmatprep.subr.bf16.mxu0 0
    %269 = vmatpush2.bf16.msra.mxu0 0
    %270 = vmatprep.subr.bf16.mxu0 0
    %271 = vmatpush2.bf16.msra.mxu0 0
    %272 = vmatprep.subr.bf16.mxu0 0
    %273 = vmatpush2.bf16.msra.mxu0 0
    %274 = vmatprep.subr.bf16.mxu0 0
    %275 = vmatpush2.bf16.msra.mxu0 0
    %276 = vmatprep.subr.bf16.mxu0 0
    %277 = vmatpush2.bf16.msra.mxu0 0
    %278 = vmatprep.subr.bf16.mxu0 0
    %279 = vmatpush2.bf16.msra.mxu0 0
    %280 = vmatprep.mubr.bf16.mxu0 0
    %281 = vmatmul.mubr.bf16.gmra.mxu0 %v174
    %v282 = vpop.f32.mrf.mxu0
    %v283 = vadd.f32 %v198, %v282
    %v284 = vpop.f32.mrf.mxu0
    %v285 = vpop.f32.mrf.mxu0
    %v286 = vpop.f32.mrf.mxu0
    %287 = vdwg.mxu0
    %v288 = vmax.f32 %v283, 0.0
    %s289 = sld [smem:[#allocation2 + $0x1]]
    %v290 = vstv %s289
    %v291 = vmul.f32 %v290, %v288
    %v292 = vadd.f32 %v173, %v291
    %v293 = vpack.c.bf16 %v292, %v292
    %s294 = scalar_lea.vmem [#allocation7], 128
    %v295 = vld [vmem:[%s294] sm:$0xf]
    %v296 = vld [vmem:[%s294 + $0x4] sm:$0xf]
    %v297 = vld [vmem:[%s294 + $0x8] sm:$0xf]
    %v298 = vld [vmem:[%s294 + $0xc] sm:$0xf]
    %v299 = vld [vmem:[%s294 + $0x10] sm:$0xf]
    %v300 = vld [vmem:[%s294 + $0x14] sm:$0xf]
    %v301 = vld [vmem:[%s294 + $0x18] sm:$0xf]
    %v302 = vld [vmem:[%s294 + $0x1c] sm:$0xf]
    %v303 = vld [vmem:[%s294 + $0x20] sm:$0xf]
    %v304 = vld [vmem:[%s294 + $0x24] sm:$0xf]
    %v305 = vld [vmem:[%s294 + $0x28] sm:$0xf]
    %v306 = vld [vmem:[%s294 + $0x2c] sm:$0xf]
    %v307 = vld [vmem:[%s294 + $0x30] sm:$0xf]
    %v308 = vld [vmem:[%s294 + $0x34] sm:$0xf]
    %v309 = vld [vmem:[%s294 + $0x38] sm:$0xf]
    %v310 = vld [vmem:[%s294 + $0x3c] sm:$0xf]
    %s311 = scalar_lea.vmem %s3, 2
    %v312 = vld [vmem:[%s311] sm:$0x1]
    %v314 = vlaneseq
    %v315 = vshrl.u32 %v314, 7
    %v316 = vsub.s32 0, %v315
    %v317 = vrot.slane %v312, %v316
    %v335 = vunpack.c.l.b16 %v295
    %v336 = vunpack.c.l.b16 %v296
    %v337 = vunpack.c.l.b16 %v297
    %v338 = vunpack.c.l.b16 %v298
    %v339 = vunpack.c.l.b16 %v299
    %v340 = vunpack.c.l.b16 %v300
    %v341 = vunpack.c.l.b16 %v301
    %v342 = vunpack.c.l.b16 %v302
    %v343 = vunpack.c.l.b16 %v303
    %v344 = vunpack.c.l.b16 %v304
    %v345 = vunpack.c.l.b16 %v305
    %v346 = vunpack.c.l.b16 %v306
    %v347 = vunpack.c.l.b16 %v307
    %v348 = vunpack.c.l.b16 %v308
    %v349 = vunpack.c.l.b16 %v309
    %v350 = vunpack.c.l.b16 %v310
    %v351 = vpack.c.b16 %v336, %v335
    %v352 = vpack.c.b16 %v338, %v337
    %v353 = vpack.c.b16 %v340, %v339
    %v354 = vpack.c.b16 %v342, %v341
    %v355 = vpack.c.b16 %v344, %v343
    %v356 = vpack.c.b16 %v346, %v345
    %v357 = vpack.c.b16 %v348, %v347
    %v358 = vpack.c.b16 %v350, %v349
    %367 = vmatprep.subr.bf16.mxu0 0
    %368 = vmatpush1.bf16.msra.mxu0 %v358
    %369 = vmatprep.subr.bf16.mxu0 0
    %370 = vmatpush1.bf16.msra.mxu0 %v357
    %371 = vmatprep.subr.bf16.mxu0 0
    %372 = vmatpush1.bf16.msra.mxu0 %v356
    %373 = vmatprep.subr.bf16.mxu0 0
    %374 = vmatpush1.bf16.msra.mxu0 %v355
    %375 = vmatprep.subr.bf16.mxu0 0
    %376 = vmatpush1.bf16.msra.mxu0 %v354
    %377 = vmatprep.subr.bf16.mxu0 0
    %378 = vmatpush1.bf16.msra.mxu0 %v353
    %379 = vmatprep.subr.bf16.mxu0 0
    %380 = vmatpush1.bf16.msra.mxu0 %v352
    %381 = vmatprep.subr.bf16.mxu0 0
    %382 = vmatpush1.bf16.msra.mxu0 %v351
    %383 = vmatprep.subr.bf16.mxu0 0
    %384 = vmatpush2.bf16.msra.mxu0 0
    %385 = vmatprep.subr.bf16.mxu0 0
    %386 = vmatpush2.bf16.msra.mxu0 0
    %387 = vmatprep.subr.bf16.mxu0 0
    %388 = vmatpush2.bf16.msra.mxu0 0
    %389 = vmatprep.subr.bf16.mxu0 0
    %390 = vmatpush2.bf16.msra.mxu0 0
    %391 = vmatprep.subr.bf16.mxu0 0
    %392 = vmatpush2.bf16.msra.mxu0 0
    %393 = vmatprep.subr.bf16.mxu0 0
    %394 = vmatpush2.bf16.msra.mxu0 0
    %395 = vmatprep.subr.bf16.mxu0 0
    %396 = vmatpush2.bf16.msra.mxu0 0
    %397 = vmatprep.subr.bf16.mxu0 0
    %398 = vmatpush2.bf16.msra.mxu0 0
    %399 = vmatprep.mubr.bf16.mxu0 0
    %400 = vmatmul.mubr.bf16.gmra.mxu0 %v293
    %v401 = vpop.f32.mrf.mxu0
    %v402 = vadd.f32 %v317, %v401
    %v403 = vpop.f32.mrf.mxu0
    %v404 = vpop.f32.mrf.mxu0
    %v405 = vpop.f32.mrf.mxu0
    %406 = vdwg.mxu0
    %v407 = vmax.f32 %v402, 0.0
    %s408 = sld [smem:[#allocation2 + $0x2]]
    %v409 = vstv %s408
    %v410 = vmul.f32 %v409, %v407
    %v411 = vadd.f32 %v292, %v410
    %v412 = vpack.c.bf16 %v411, %v411
    %s413 = scalar_lea.vmem [#allocation7], 192
    %v414 = vld [vmem:[%s413] sm:$0xf]
    %v415 = vld [vmem:[%s413 + $0x4] sm:$0xf]
    %v416 = vld [vmem:[%s413 + $0x8] sm:$0xf]
    %v417 = vld [vmem:[%s413 + $0xc] sm:$0xf]
    %v418 = vld [vmem:[%s413 + $0x10] sm:$0xf]
    %v419 = vld [vmem:[%s413 + $0x14] sm:$0xf]
    %v420 = vld [vmem:[%s413 + $0x18] sm:$0xf]
    %v421 = vld [vmem:[%s413 + $0x1c] sm:$0xf]
    %v422 = vld [vmem:[%s413 + $0x20] sm:$0xf]
    %v423 = vld [vmem:[%s413 + $0x24] sm:$0xf]
    %v424 = vld [vmem:[%s413 + $0x28] sm:$0xf]
    %v425 = vld [vmem:[%s413 + $0x2c] sm:$0xf]
    %v426 = vld [vmem:[%s413 + $0x30] sm:$0xf]
    %v427 = vld [vmem:[%s413 + $0x34] sm:$0xf]
    %v428 = vld [vmem:[%s413 + $0x38] sm:$0xf]
    %v429 = vld [vmem:[%s413 + $0x3c] sm:$0xf]
    %s430 = scalar_lea.vmem %s3, 3
    %v431 = vld [vmem:[%s430] sm:$0x1]
    %v433 = vlaneseq
    %v434 = vshrl.u32 %v433, 7
    %v435 = vsub.s32 0, %v434
    %v436 = vrot.slane %v431, %v435
    %v454 = vunpack.c.l.b16 %v414
    %v455 = vunpack.c.l.b16 %v415
    %v456 = vunpack.c.l.b16 %v416
    %v457 = vunpack.c.l.b16 %v417
    %v458 = vunpack.c.l.b16 %v418
    %v459 = vunpack.c.l.b16 %v419
    %v460 = vunpack.c.l.b16 %v420
    %v461 = vunpack.c.l.b16 %v421
    %v462 = vunpack.c.l.b16 %v422
    %v463 = vunpack.c.l.b16 %v423
    %v464 = vunpack.c.l.b16 %v424
    %v465 = vunpack.c.l.b16 %v425
    %v466 = vunpack.c.l.b16 %v426
    %v467 = vunpack.c.l.b16 %v427
    %v468 = vunpack.c.l.b16 %v428
    %v469 = vunpack.c.l.b16 %v429
    %v470 = vpack.c.b16 %v455, %v454
    %v471 = vpack.c.b16 %v457, %v456
    %v472 = vpack.c.b16 %v459, %v458
    %v473 = vpack.c.b16 %v461, %v460
    %v474 = vpack.c.b16 %v463, %v462
    %v475 = vpack.c.b16 %v465, %v464
    %v476 = vpack.c.b16 %v467, %v466
    %v477 = vpack.c.b16 %v469, %v468
    %486 = vmatprep.subr.bf16.mxu0 0
    %487 = vmatpush1.bf16.msra.mxu0 %v477
    %488 = vmatprep.subr.bf16.mxu0 0
    %489 = vmatpush1.bf16.msra.mxu0 %v476
    %490 = vmatprep.subr.bf16.mxu0 0
    %491 = vmatpush1.bf16.msra.mxu0 %v475
    %492 = vmatprep.subr.bf16.mxu0 0
    %493 = vmatpush1.bf16.msra.mxu0 %v474
    %494 = vmatprep.subr.bf16.mxu0 0
    %495 = vmatpush1.bf16.msra.mxu0 %v473
    %496 = vmatprep.subr.bf16.mxu0 0
    %497 = vmatpush1.bf16.msra.mxu0 %v472
    %498 = vmatprep.subr.bf16.mxu0 0
    %499 = vmatpush1.bf16.msra.mxu0 %v471
    %500 = vmatprep.subr.bf16.mxu0 0
    %501 = vmatpush1.bf16.msra.mxu0 %v470
    %502 = vmatprep.subr.bf16.mxu0 0
    %503 = vmatpush2.bf16.msra.mxu0 0
    %504 = vmatprep.subr.bf16.mxu0 0
    %505 = vmatpush2.bf16.msra.mxu0 0
    %506 = vmatprep.subr.bf16.mxu0 0
    %507 = vmatpush2.bf16.msra.mxu0 0
    %508 = vmatprep.subr.bf16.mxu0 0
    %509 = vmatpush2.bf16.msra.mxu0 0
    %510 = vmatprep.subr.bf16.mxu0 0
    %511 = vmatpush2.bf16.msra.mxu0 0
    %512 = vmatprep.subr.bf16.mxu0 0
    %513 = vmatpush2.bf16.msra.mxu0 0
    %514 = vmatprep.subr.bf16.mxu0 0
    %515 = vmatpush2.bf16.msra.mxu0 0
    %516 = vmatprep.subr.bf16.mxu0 0
    %517 = vmatpush2.bf16.msra.mxu0 0
    %518 = vmatprep.mubr.bf16.mxu0 0
    %519 = vmatmul.mubr.bf16.gmra.mxu0 %v412
    %v520 = vpop.f32.mrf.mxu0
    %v521 = vadd.f32 %v436, %v520
    %v522 = vpop.f32.mrf.mxu0
    %v523 = vpop.f32.mrf.mxu0
    %v524 = vpop.f32.mrf.mxu0
    %525 = vdwg.mxu0
    %v526 = vmax.f32 %v521, 0.0
    %s527 = sld [smem:[#allocation2 + $0x3]]
    %v528 = vstv %s527
    %v529 = vmul.f32 %v528, %v526
    %v530 = vadd.f32 %v411, %v529
    %531 = vst [vmem:[#allocation9] sm:$0xff] %v530
    // Predicated region
    $region30: #{tpu_custom_call.1} parent=1 // pred_check
      _
    $region31: #{tpu_custom_call.1} parent=1 // pred_check_branch
      %533 = sbr.rel (0) target = $region33
    $region32: #{tpu_custom_call.1} parent=1 // pred_region
      %s535 = ssub.s32 128, 128
      %536 = vsyncadd [#allocation4], %s535
      %s538 = sshll.u32 [#allocation9], 4
      %s539 = int_to_ptr.vmem [resolvable:$true] %s538
      %541 = dma.vmem_to_hbm [thread:$0]  %s539, 128, %s4, [#allocation4]
    $region33: #{tpu_custom_call.1} parent=1 // pred_fallthru
      _
    // Predicated region
    $region34: #{tpu_custom_call.1} parent=1 // pred_check
      _
    $region35: #{tpu_custom_call.1} parent=1 // pred_check_branch
      %543 = sbr.rel (0) target = $region37
    $region36: #{tpu_custom_call.1} parent=1 // pred_region
      %544 = dma.done [#allocation4], 128
    $region37: #{tpu_custom_call.1} parent=1 // pred_fallthru
      _
    %545 = vsyncpa [#allocation3], 1
    %546 = vsyncpa [#allocation8], 1
    %547 = vsyncpa [#allocation4], 1
    %548 = vsyncpa [#allocation5], 1

</llo_original>
